<compile_context>
chip_gen: v7x
topology: tpu7x:2x2x1
jax: 0.10.0
libtpu: 0.0.40
codegen_flags: <defaults>
</compile_context>

<pallas_src>
import functools

import jax
import jax.numpy as jnp
from jax.experimental import pallas as pl
from jax.experimental.pallas import tpu as pltpu


def _round_up(x: int, m: int) -> int:
    return ((x + m - 1) // m) * m


def decoder_layer_kernel(tz_ref, u_ref, a_ref, w_ref, b_ref, out_ref, hatz_ref,
                         *, block_k, dot_dtype, cache_across_j):
    k = pl.program_id(2)
    a_off = pl.multiple_of(k * block_k, 128)          # lane offset into resident a
    z_off = a_off if cache_across_j else 0            # offset into hat_z scratch

    def compute_hat_z():
        tz = tz_ref[...]                              # [tm, tk]
        u = u_ref[...]                                # [tm, tk]
        a = a_ref[:, pl.ds(a_off, block_k)]           # [10, tk] (VMEM-resident)
        # mu = a1*sigmoid(a2*u + a3) + a4*u + a5          (sigmoid -> EUP slot)
        mu = a[0:1] * jax.nn.sigmoid(a[1:2] * u + a[2:3]) + a[3:4] * u + a[4:5]
        # v  = a6*sigmoid(a7*u + a8) + a9*u + a10
        v = a[5:6] * jax.nn.sigmoid(a[6:7] * u + a[7:8]) + a[8:9] * u + a[9:10]
        # hat_z = (tilde_z - mu) * v + mu
        hat_z = (tz - mu) * v + mu
        hatz_ref[:, pl.ds(z_off, block_k)] = hat_z.astype(dot_dtype)

    if cache_across_j:
        # hat_z depends only on (i, k): compute it once (first output-column
        # pass) and reuse the cached slab for j > 0.
        pl.when(pl.program_id(1) == 0)(compute_hat_z)
    else:
        # Single output-column block: no redundancy, compute unconditionally.
        compute_hat_z()

    @pl.when(k == 0)
    def _init():
        # Output block is resident across the (innermost) K axis; seed it with
        # the bias so no separate finalize / accumulator copy is needed.
        out_ref[...] = jnp.broadcast_to(b_ref[...], out_ref.shape).astype(out_ref.dtype)

    out_ref[...] += jnp.dot(hatz_ref[:, pl.ds(z_off, block_k)], w_ref[...],
                            preferred_element_type=jnp.float32)


def decoder_layer_forward(tilde_z_l, u_l, a_params, W, b, *,
                          dot_dtype=jnp.bfloat16,
                          max_tm=256, max_tk=512,
                          max_full_tn=2048, fallback_tn=512):
    """Fused DecoderLayer forward: Linear(g(tilde_z_l, u_l)) + bias."""
    N, d_in = tilde_z_l.shape
    assert W.shape[0] == d_in
    d_out = W.shape[1]
    itemsize = jnp.dtype(dot_dtype).itemsize

    # ---- tile selection -----------------------------------------------------
    tm = min(max_tm, _round_up(N, 8))
    Np = _round_up(N, tm)

    tk = min(max_tk, _round_up(d_in, 128))
    Kp = _round_up(d_in, tk)

    Dp128 = _round_up(d_out, 128)
    tn = Dp128 if Dp128 <= max_full_tn else min(fallback_tn, max_full_tn)
    tn = _round_up(tn, 128)
    Dp = _round_up(d_out, tn)

    Gi, Gj, Gk = Np // tm, Dp // tn, Kp // tk

    # Cache hat_z across the output-column axis only when there is more than
    # one j block and the cache fits a modest VMEM budget.
    cache_across_j = (Gj > 1) and (tm * Kp * itemsize <= 12 * 1024 * 1024)
    scratch_k = Kp if cache_across_j else tk
    # TODO(synk): when Gj > 1 and caching is disabled (huge d_in), hat_z is
    # recomputed per output-column tile; tz/u are also re-DMA'd per j in both
    # fallback cases (needs memory_space=pl.ANY + manual copy to remove).

    # ---- guarded zero-padding (inert: padded a/W rows/cols are zero) --------
    def pad2(x, rows, cols):
        pr, pc = rows - x.shape[0], cols - x.shape[1]
        if pr or pc:
            x = jnp.pad(x, ((0, pr), (0, pc)))
        return x

    tz_p = pad2(tilde_z_l, Np, Kp)
    u_p = pad2(u_l, Np, Kp)
    a_p = pad2(a_params, 10, Kp)
    w_p = pad2(W, Kp, Dp)
    if w_p.dtype != dot_dtype:
        w_p = w_p.astype(dot_dtype)        # halves W HBM/VMEM traffic for bf16
    b_p = pad2(b, 1, Dp)

    # ---- VMEM budget / cost estimate ----------------------------------------
    vmem_est = (2 * 2 * tm * tk * 4            # tz + u, double-buffered (f32)
                + 2 * 10 * Kp * 4              # a (resident)
                + 2 * tk * tn * itemsize       # W, double-buffered
                + 2 * tn * 4                   # bias
                + 2 * tm * tn * 4              # output block, double-buffered
                + tm * scratch_k * itemsize)   # hat_z scratch
    vmem_limit = int(min(48 * 1024 * 1024, max(32 * 1024 * 1024, 1.3 * vmem_est)))

    cost = pl.CostEstimate(
        flops=2 * Np * Kp * Dp + 10 * Np * Kp,
        transcendentals=2 * Np * Kp,
        bytes_accessed=(2 * 4 * Np * Kp * (1 if (Gj == 1 or cache_across_j) else Gj)
                        + itemsize * Kp * Dp * Gi
                        + 4 * Np * Dp
                        + 4 * 10 * Kp + 4 * Dp),
    )

    kernel = functools.partial(decoder_layer_kernel, block_k=tk,
                               dot_dtype=dot_dtype,
                               cache_across_j=cache_across_j)

    out_p = pl.pallas_call(
        kernel,
        out_shape=jax.ShapeDtypeStruct((Np, Dp), jnp.float32),
        grid_spec=pltpu.PrefetchScalarGridSpec(
            num_scalar_prefetch=0,
            grid=(Gi, Gj, Gk),
            in_specs=[
                pl.BlockSpec((tm, tk), lambda i, j, k: (i, k)),   # tilde_z
                pl.BlockSpec((tm, tk), lambda i, j, k: (i, k)),   # u
                pl.BlockSpec((10, Kp), lambda i, j, k: (0, 0)),   # a (resident)
                pl.BlockSpec((tk, tn), lambda i, j, k: (k, j)),   # W
                pl.BlockSpec((1, tn), lambda i, j, k: (0, j)),    # bias
            ],
            out_specs=pl.BlockSpec((tm, tn), lambda i, j, k: (i, j)),
            scratch_shapes=[pltpu.VMEM((tm, scratch_k), dot_dtype)],
        ),
        compiler_params=pltpu.CompilerParams(
            # j must be "arbitrary": the hat_z cache is per-core VMEM state and
            # would break if megacore split the j axis across TensorCores.
            dimension_semantics=("parallel", "arbitrary", "arbitrary"),
            vmem_limit_bytes=vmem_limit,
        ),
        cost_estimate=cost,
    )(tz_p, u_p, a_p, w_p, b_p)

    if Np != N or Dp != d_out:
        out_p = out_p[:N, :d_out]
    return out_p


def decoder_layer_ref(tilde_z_l, u_l, a_params, W, b):
    """Pure-JAX reference mirroring the PyTorch module."""
    a = [a_params[i:i + 1] for i in range(10)]
    mu = a[0] * jax.nn.sigmoid(a[1] * u_l + a[2]) + a[3] * u_l + a[4]
    v = a[5] * jax.nn.sigmoid(a[6] * u_l + a[7]) + a[8] * u_l + a[9]
    hat_z = (tilde_z_l - mu) * v + mu
    return jnp.dot(hat_z, W, precision=jax.lax.Precision.HIGHEST) + b


def _make_inputs(key, N, d_in, d_out, bias=True):
    k_tz, k_u, k_a, k_w = jax.random.split(key, 4)
    tilde_z_l = jax.random.normal(k_tz, (N, d_in), dtype=jnp.float32)
    u_l = jax.random.normal(k_u, (N, d_in), dtype=jnp.float32)

    # Module defaults: a2 = a7 = 1, rest 0; small perturbation so both gates
    # are actually exercised.
    a_params = jnp.zeros((10, d_in), jnp.float32).at[1].set(1.0).at[6].set(1.0)
    a_params = a_params + 0.1 * jax.random.normal(k_a, (10, d_in), dtype=jnp.float32)

    # Linear V: xavier_uniform weight (torch shape (d_out, d_in)), stored (d_in, d_out).
    bound = (6.0 / (d_in + d_out)) ** 0.5
    W = jax.random.uniform(k_w, (d_in, d_out), dtype=jnp.float32,
                           minval=-bound, maxval=bound)
    b = (jnp.full((1, d_out), 0.01, jnp.float32) if bias
         else jnp.zeros((1, d_out), jnp.float32))
    return tilde_z_l, u_l, a_params, W, b


if __name__ == "__main__":
    key = jax.random.PRNGKey(0)
    k1, k2, k3 = jax.random.split(key, 3)

    # --- 1) small module-consistent shapes, f32 MXU path, tight tolerance ----
    N, d_in, d_out = 8, 32, 32
    tz, u, a_params, W, b = _make_inputs(k1, N, d_in, d_out, bias=True)
    out = jax.block_until_ready(
        decoder_layer_forward(tz, u, a_params, W, b, dot_dtype=jnp.float32))
    ref = decoder_layer_ref(tz, u, a_params, W, b)
    assert out.shape == (N, d_out)
    assert jnp.allclose(out, ref, atol=1e-4, rtol=1e-4), "small-shape mismatch"

    # --- 2) row/K tiling exercised (Gi=2, Gk=2), default bf16 MXU path -------
    N2, d_in2, d_out2 = 384, 640, 384
    tz2, u2, a2, W2, b2 = _make_inputs(k2, N2, d_in2, d_out2, bias=True)
    out2 = jax.block_until_ready(decoder_layer_forward(tz2, u2, a2, W2, b2))
    ref2 = decoder_layer_ref(tz2, u2, a2, W2, b2)
    assert out2.shape == (N2, d_out2)
    assert jnp.allclose(out2, ref2, atol=5e-2, rtol=5e-2), "bf16 tiled mismatch"

    # --- 3) force the multi-j fallback (hat_z cached across output tiles) ----
    N3, d_in3, d_out3 = 64, 256, 512
    tz3, u3, a3, W3, b3 = _make_inputs(k3, N3, d_in3, d_out3, bias=True)
    out3 = jax.block_until_ready(
        decoder_layer_forward(tz3, u3, a3, W3, b3, dot_dtype=jnp.float32,
                              max_full_tn=128, fallback_tn=128))
    ref3 = decoder_layer_ref(tz3, u3, a3, W3, b3)
    assert out3.shape == (N3, d_out3)
    assert jnp.allclose(out3, ref3, atol=1e-4, rtol=1e-4), "hat_z-cache mismatch"

    # TODO(synk): the module's `self.buffer = hat_z_l` side effect and the
    # d_out=None (return None) branch are not materialized by this kernel.
    print("KERNEL_OK")
</pallas_src>

<mosaic_0001>
module attributes {stable_mosaic.version = 11 : i64} {
  func.func @decoder_layer_kernel(%arg0: i32, %arg1: i32, %arg2: i32, %arg3: memref<8x128xf32, #tpu.memory_space<vmem>>, %arg4: memref<8x128xf32, #tpu.memory_space<vmem>>, %arg5: memref<10x128xf32, #tpu.memory_space<vmem>>, %arg6: memref<128x128xf32, #tpu.memory_space<vmem>>, %arg7: memref<1x128xf32, #tpu.memory_space<vmem>>, %arg8: memref<8x128xf32, #tpu.memory_space<vmem>>, %arg9: memref<8x128xf32, #tpu.memory_space<vmem>>) attributes {dimension_semantics = [#tpu.dimension_semantics<parallel>, #tpu.dimension_semantics<arbitrary>, #tpu.dimension_semantics<arbitrary>], iteration_bounds = array<i64: 1, 1, 1>, scalar_prefetch = 0 : i64, scratch_operands = 1 : i64, tpu.core_type = #tpu.core_type<tc>, window_params = [{transform_indices = @transform_0, window_bounds = array<i64: 8, 128>}, {transform_indices = @transform_1, window_bounds = array<i64: 8, 128>}, {pipeline_mode = #tpu.pipeline_mode<synchronous>, transform_indices = @transform_2, window_bounds = array<i64: 10, 128>}, {transform_indices = @transform_3, window_bounds = array<i64: 128, 128>}, {transform_indices = @transform_4, window_bounds = array<i64: 1, 128>}, {transform_indices = @transform_5, window_bounds = array<i64: 8, 128>}]} {
    %c128_i32 = arith.constant 128 : i32
    %0 = arith.muli %arg2, %c128_i32 : i32
    %1 = tpu.assume_multiple %0, 128 : i32
    %c0 = arith.constant 0 : index
    %c0_0 = arith.constant 0 : index
    %2 = vector.load %arg3[%c0, %c0_0] : memref<8x128xf32, #tpu.memory_space<vmem>>, vector<8x128xf32>
    %c0_1 = arith.constant 0 : index
    %c0_2 = arith.constant 0 : index
    %3 = vector.load %arg4[%c0_1, %c0_2] : memref<8x128xf32, #tpu.memory_space<vmem>>, vector<8x128xf32>
    %c0_3 = arith.constant 0 : index
    %4 = arith.index_cast %1 : i32 to index
    %5 = vector.load %arg5[%c0_3, %4] : memref<10x128xf32, #tpu.memory_space<vmem>>, vector<10x128xf32>
    %6 = vector.extract_strided_slice %5 {offsets = [0, 0], sizes = [1, 128], strides = [1, 1]} : vector<10x128xf32> to vector<1x128xf32>
    %7 = vector.extract_strided_slice %5 {offsets = [1, 0], sizes = [1, 128], strides = [1, 1]} : vector<10x128xf32> to vector<1x128xf32>
    %8 = vector.broadcast %7 : vector<1x128xf32> to vector<8x128xf32>
    %9 = arith.mulf %8, %3 : vector<8x128xf32>
    %10 = vector.extract_strided_slice %5 {offsets = [2, 0], sizes = [1, 128], strides = [1, 1]} : vector<10x128xf32> to vector<1x128xf32>
    %11 = vector.broadcast %10 : vector<1x128xf32> to vector<8x128xf32>
    %12 = arith.addf %9, %11 : vector<8x128xf32>
    %13 = arith.negf %12 : vector<8x128xf32>
    %14 = math.exp %13 : vector<8x128xf32>
    %cst = arith.constant 1.000000e+00 : f32
    %15 = vector.broadcast %cst : f32 to vector<8x128xf32>
    %16 = arith.addf %15, %14 : vector<8x128xf32>
    %17 = arith.divf %15, %16 : vector<8x128xf32>
    %18 = vector.broadcast %6 : vector<1x128xf32> to vector<8x128xf32>
    %19 = arith.mulf %18, %17 : vector<8x128xf32>
    %20 = vector.extract_strided_slice %5 {offsets = [3, 0], sizes = [1, 128], strides = [1, 1]} : vector<10x128xf32> to vector<1x128xf32>
    %21 = vector.broadcast %20 : vector<1x128xf32> to vector<8x128xf32>
    %22 = arith.mulf %21, %3 : vector<8x128xf32>
    %23 = arith.addf %19, %22 : vector<8x128xf32>
    %24 = vector.extract_strided_slice %5 {offsets = [4, 0], sizes = [1, 128], strides = [1, 1]} : vector<10x128xf32> to vector<1x128xf32>
    %25 = vector.broadcast %24 : vector<1x128xf32> to vector<8x128xf32>
    %26 = arith.addf %23, %25 : vector<8x128xf32>
    %27 = vector.extract_strided_slice %5 {offsets = [5, 0], sizes = [1, 128], strides = [1, 1]} : vector<10x128xf32> to vector<1x128xf32>
    %28 = vector.extract_strided_slice %5 {offsets = [6, 0], sizes = [1, 128], strides = [1, 1]} : vector<10x128xf32> to vector<1x128xf32>
    %29 = vector.broadcast %28 : vector<1x128xf32> to vector<8x128xf32>
    %30 = arith.mulf %29, %3 : vector<8x128xf32>
    %31 = vector.extract_strided_slice %5 {offsets = [7, 0], sizes = [1, 128], strides = [1, 1]} : vector<10x128xf32> to vector<1x128xf32>
    %32 = vector.broadcast %31 : vector<1x128xf32> to vector<8x128xf32>
    %33 = arith.addf %30, %32 : vector<8x128xf32>
    %34 = arith.negf %33 : vector<8x128xf32>
    %35 = math.exp %34 : vector<8x128xf32>
    %cst_4 = arith.constant 1.000000e+00 : f32
    %36 = vector.broadcast %cst_4 : f32 to vector<8x128xf32>
    %37 = arith.addf %36, %35 : vector<8x128xf32>
    %38 = arith.divf %36, %37 : vector<8x128xf32>
    %39 = vector.broadcast %27 : vector<1x128xf32> to vector<8x128xf32>
    %40 = arith.mulf %39, %38 : vector<8x128xf32>
    %41 = vector.extract_strided_slice %5 {offsets = [8, 0], sizes = [1, 128], strides = [1, 1]} : vector<10x128xf32> to vector<1x128xf32>
    %42 = vector.broadcast %41 : vector<1x128xf32> to vector<8x128xf32>
    %43 = arith.mulf %42, %3 : vector<8x128xf32>
    %44 = arith.addf %40, %43 : vector<8x128xf32>
    %45 = vector.extract_strided_slice %5 {offsets = [9, 0], sizes = [1, 128], strides = [1, 1]} : vector<10x128xf32> to vector<1x128xf32>
    %46 = vector.broadcast %45 : vector<1x128xf32> to vector<8x128xf32>
    %47 = arith.addf %44, %46 : vector<8x128xf32>
    %48 = arith.subf %2, %26 : vector<8x128xf32>
    %49 = arith.mulf %48, %47 : vector<8x128xf32>
    %50 = arith.addf %49, %26 : vector<8x128xf32>
    %c0_5 = arith.constant 0 : index
    %c0_6 = arith.constant 0 : index
    %51 = vector.load %arg9[%c0_5, %c0_6] : memref<8x128xf32, #tpu.memory_space<vmem>>, vector<8x128xf32>
    tpu.vector_store %arg9[%c0_5, %c0_6], %50 {strides = array<i32>} : memref<8x128xf32, #tpu.memory_space<vmem>>, vector<8x128xf32>,
    %c0_i32 = arith.constant 0 : i32
    %52 = arith.cmpi eq, %arg2, %c0_i32 : i32
    %53 = arith.extui %52 : i1 to i32
    %c0_i32_7 = arith.constant 0 : i32
    %54 = arith.cmpi ne, %53, %c0_i32_7 : i32
    scf.if %54 {
      %c0_17 = arith.constant 0 : index
      %c0_18 = arith.constant 0 : index
      %61 = vector.load %arg7[%c0_17, %c0_18] : memref<1x128xf32, #tpu.memory_space<vmem>>, vector<1x128xf32>
      %62 = vector.shape_cast %61 : vector<1x128xf32> to vector<1x128xf32>
      %63 = vector.broadcast %62 : vector<1x128xf32> to vector<8x128xf32>
      %c0_19 = arith.constant 0 : index
      %c0_20 = arith.constant 0 : index
      %64 = vector.load %arg8[%c0_19, %c0_20] : memref<8x128xf32, #tpu.memory_space<vmem>>, vector<8x128xf32>
      tpu.vector_store %arg8[%c0_19, %c0_20], %63 {strides = array<i32>} : memref<8x128xf32, #tpu.memory_space<vmem>>, vector<8x128xf32>,
    } else {
    }
    %c0_8 = arith.constant 0 : index
    %c0_9 = arith.constant 0 : index
    %55 = vector.load %arg8[%c0_8, %c0_9] : memref<8x128xf32, #tpu.memory_space<vmem>>, vector<8x128xf32>
    %c0_10 = arith.constant 0 : index
    %c0_11 = arith.constant 0 : index
    %56 = vector.load %arg9[%c0_10, %c0_11] : memref<8x128xf32, #tpu.memory_space<vmem>>, vector<8x128xf32>
    %c0_12 = arith.constant 0 : index
    %c0_13 = arith.constant 0 : index
    %57 = vector.load %arg6[%c0_12, %c0_13] : memref<128x128xf32, #tpu.memory_space<vmem>>, vector<128x128xf32>
    %cst_14 = arith.constant dense<0.000000e+00> : vector<8x128xf32>
    %58 = tpu.matmul %56, %57, %cst_14 {dimension_numbers = #tpu.dot_dimension_numbers<[1], [0], [0], [1], [0, 0, 1, 1], [], []>} : vector<8x128xf32>, vector<128x128xf32>, vector<8x128xf32> -> vector<8x128xf32>
    %59 = arith.addf %55, %58 : vector<8x128xf32>
    %c0_15 = arith.constant 0 : index
    %c0_16 = arith.constant 0 : index
    %60 = vector.load %arg8[%c0_15, %c0_16] : memref<8x128xf32, #tpu.memory_space<vmem>>, vector<8x128xf32>
    tpu.vector_store %arg8[%c0_15, %c0_16], %59 {strides = array<i32>} : memref<8x128xf32, #tpu.memory_space<vmem>>, vector<8x128xf32>,
    return
  }
  func.func @transform_0(%arg0: i32, %arg1: i32, %arg2: i32) -> (i32, i32) {
    %c0_i32 = arith.constant 0 : i32
    return %arg0, %arg2 : i32, i32
  }
  func.func @transform_1(%arg0: i32, %arg1: i32, %arg2: i32) -> (i32, i32) {
    %c0_i32 = arith.constant 0 : i32
    return %arg0, %arg2 : i32, i32
  }
  func.func @transform_2(%arg0: i32, %arg1: i32, %arg2: i32) -> (i32, i32) {
    %c0_i32 = arith.constant 0 : i32
    %c0_i32_0 = arith.constant 0 : i32
    %c0_i32_1 = arith.constant 0 : i32
    return %c0_i32, %c0_i32_0 : i32, i32
  }
  func.func @transform_3(%arg0: i32, %arg1: i32, %arg2: i32) -> (i32, i32) {
    %c0_i32 = arith.constant 0 : i32
    return %arg2, %arg1 : i32, i32
  }
  func.func @transform_4(%arg0: i32, %arg1: i32, %arg2: i32) -> (i32, i32) {
    %c0_i32 = arith.constant 0 : i32
    %c0_i32_0 = arith.constant 0 : i32
    return %c0_i32, %arg1 : i32, i32
  }
  func.func @transform_5(%arg0: i32, %arg1: i32, %arg2: i32) -> (i32, i32) {
    %c0_i32 = arith.constant 0 : i32
    return %arg0, %arg1 : i32, i32
  }
}

</mosaic_0001>

<llo_original>
// kernel: tpu_custom_call.1
$region0: #{tpu_custom_call.1}
  #allocation0 [shape = 'u32[]', space=smem, size = 0x4, offset = 0x4, fixed_abs, tag = 'smem constant byte address 0x4 - core index']
  #allocation1 [shape = 'u32[144,128]{1,0:T(1,128)}', space=vmem, size = 0x12000, scoped, tag = 'internal scratch']
  #allocation2 [shape = 'f32[8,128]{1,0:T(8,128)}', space=vmem, size = 0x1000, scoped, tag = 'scratch operand']
  %s0 = inlined_call_operand.hbm [shape: f32[8,128], index: 0, kind: input, shape index: {}]
  %s1 = inlined_call_operand.hbm [shape: f32[8,128], index: 1, kind: input, shape index: {}]
  %s2 = inlined_call_operand.hbm [shape: f32[10,128], index: 2, kind: input, shape index: {}]
  %s3 = inlined_call_operand.hbm [shape: f32[128,128], index: 3, kind: input, shape index: {}]
  %s4 = inlined_call_operand.vmem [shape: f32[1,128], index: 4, kind: input, shape index: {}]
  %s5 = inlined_call_operand.hbm [shape: f32[8,128], index: 5, kind: output, shape index: {}]
  %s6 = sld [smem:[#allocation0]]
  $region50: #{tpu_custom_call.1} parent=0
    _
  %s8 = ssub.s32 1, %s6
  %s9 = scalar_select 0, %s8, %s6
  $region1: #{tpu_custom_call.1} parent=0
    #allocation3 [shape = 'u8[4096]{0}', space=vmem, size = 0x1000, scoped, tag = 'input window, operand 0, single buffered']
    #allocation4 [shape = 's32[1]{0}', space=sflag, size = 0x4, scoped, tag = 'scoped memory for tpu_custom_call.1']
    #allocation5 [shape = 's32[1]{0}', space=sflag, size = 0x4, scoped, tag = 'scoped memory for tpu_custom_call.1']
    #allocation6 [shape = 'u8[4096]{0}', space=vmem, size = 0x1000, scoped, tag = 'input window, operand 1, single buffered']
    #allocation7 [shape = 's32[1]{0}', space=sflag, size = 0x4, scoped, tag = 'scoped memory for tpu_custom_call.1']
    #allocation8 [shape = 'u8[8192]{0}', space=vmem, size = 0x2000, scoped, tag = 'input window, operand 2, single buffered']
    #allocation9 [shape = 'u8[65536]{0}', space=vmem, size = 0x10000, scoped, tag = 'input window, operand 3, single buffered']
    #allocation10 [shape = 's32[1]{0}', space=sflag, size = 0x4, scoped, tag = 'scoped memory for tpu_custom_call.1']
    #allocation11 [shape = 'u8[4096]{0}', space=vmem, size = 0x1000, scoped, tag = 'output window, operand 0, single buffered']
    %10 = vsyncpa [#allocation4], 0
    %11 = vsyncpa [#allocation7], 0
    %12 = vsyncpa [#allocation10], 0
    %13 = vsyncpa [#allocation5], 0
    // Predicated region
    $region2: #{tpu_custom_call.1} parent=1 // pred_check
      _
    $region3: #{tpu_custom_call.1} parent=1 // pred_check_branch
      %15 = sbr.rel (0) target = $region5
    $region4: #{tpu_custom_call.1} parent=1 // pred_region
      %s17 = ssub.s32 128, 128
      %18 = vsyncadd [#allocation4], %s17
      %s20 = sshll.u32 [#allocation3], 4
      %s21 = int_to_ptr.vmem [resolvable:$true] %s20
      %23 = dma.hbm_to_vmem [thread:$0]  %s0, 128, %s21, [#allocation4]
    $region5: #{tpu_custom_call.1} parent=1 // pred_fallthru
      _
    // Predicated region
    $region6: #{tpu_custom_call.1} parent=1 // pred_check
      _
    $region7: #{tpu_custom_call.1} parent=1 // pred_check_branch
      %25 = sbr.rel (0) target = $region9
    $region8: #{tpu_custom_call.1} parent=1 // pred_region
      %s27 = ssub.s32 128, 128
      %28 = vsyncadd [#allocation7], %s27
      %s30 = sshll.u32 [#allocation6], 4
      %s31 = int_to_ptr.vmem [resolvable:$true] %s30
      %33 = dma.hbm_to_vmem [thread:$0]  %s1, 128, %s31, [#allocation7]
    $region9: #{tpu_custom_call.1} parent=1 // pred_fallthru
      _
    // Predicated region
    $region10: #{tpu_custom_call.1} parent=1 // pred_check
      _
    $region11: #{tpu_custom_call.1} parent=1 // pred_check_branch
      %35 = sbr.rel (0) target = $region13
    $region12: #{tpu_custom_call.1} parent=1 // pred_region
      %s37 = ssub.s32 256, 256
      %38 = vsyncadd [#allocation7], %s37
      %s39 = sshll.u32 [#allocation8], 4
      %s40 = int_to_ptr.vmem [resolvable:$true] %s39
      %45 = dma.hbm_to_vmem [thread:$0]  %s2, 256, %s40, [#allocation7], 128, 128, 8
    $region13: #{tpu_custom_call.1} parent=1 // pred_fallthru
      _
    // Predicated region
    $region14: #{tpu_custom_call.1} parent=1 // pred_check
      _
    $region15: #{tpu_custom_call.1} parent=1 // pred_check_branch
      %47 = sbr.rel (0) target = $region17
    $region16: #{tpu_custom_call.1} parent=1 // pred_region
      %s49 = ssub.s32 2048, 2048
      %50 = vsyncadd [#allocation10], %s49
      %s51 = sshll.u32 [#allocation9], 4
      %s52 = int_to_ptr.vmem [resolvable:$true] %s51
      %57 = dma.hbm_to_vmem [thread:$0]  %s3, 2048, %s52, [#allocation10], 128, 128, 8
    $region17: #{tpu_custom_call.1} parent=1 // pred_fallthru
      _
    // Predicated region
    $region18: #{tpu_custom_call.1} parent=1 // pred_check
      _
    $region19: #{tpu_custom_call.1} parent=1 // pred_check_branch
      %59 = sbr.rel (0) target = $region21
    $region20: #{tpu_custom_call.1} parent=1 // pred_region
      _
    $region21: #{tpu_custom_call.1} parent=1 // pred_fallthru
      _
    // Predicated region
    $region22: #{tpu_custom_call.1} parent=1 // pred_check
      _
    $region23: #{tpu_custom_call.1} parent=1 // pred_check_branch
      %61 = sbr.rel (0) target = $region25
    $region24: #{tpu_custom_call.1} parent=1 // pred_region
      %62 = dma.done [#allocation4], 128
    $region25: #{tpu_custom_call.1} parent=1 // pred_fallthru
      _
    // Predicated region
    $region26: #{tpu_custom_call.1} parent=1 // pred_check
      _
    $region27: #{tpu_custom_call.1} parent=1 // pred_check_branch
      %64 = sbr.rel (0) target = $region29
    $region28: #{tpu_custom_call.1} parent=1 // pred_region
      %65 = dma.done [#allocation7], 128
    $region29: #{tpu_custom_call.1} parent=1 // pred_fallthru
      _
    // Predicated region
    $region30: #{tpu_custom_call.1} parent=1 // pred_check
      _
    $region31: #{tpu_custom_call.1} parent=1 // pred_check_branch
      %67 = sbr.rel (0) target = $region33
    $region32: #{tpu_custom_call.1} parent=1 // pred_region
      %68 = dma.done [#allocation7], 256
    $region33: #{tpu_custom_call.1} parent=1 // pred_fallthru
      _
    // Predicated region
    $region34: #{tpu_custom_call.1} parent=1 // pred_check
      _
    $region35: #{tpu_custom_call.1} parent=1 // pred_check_branch
      %70 = sbr.rel (0) target = $region37
    $region36: #{tpu_custom_call.1} parent=1 // pred_region
      %71 = dma.done [#allocation10], 2048
    $region37: #{tpu_custom_call.1} parent=1 // pred_fallthru
      _
    %s72 = smul.u32 0, 128
    %v73 = vld [vmem:[#allocation3] sm:$0xff]
    %v74 = vld [vmem:[#allocation6] sm:$0xff]
    %s75 = sshra.s32 %s72, 7
    %s76 = sand.u32 %s72, 127
    %s77 = scalar_lea.vmem [#allocation8], %s75
    %v78 = vld [vmem:[%s77] sm:$0xff]
    %v79 = vld [vmem:[%s77 + $0x8] sm:$0x3]
    %v80 = vlaneseq
    %v81 = vshrl.u32 %v80, 7
    %v82 = vsub.s32 1, %v81
    %v83 = vrot.slane %v78, %v82
    %v84 = vmul.f32 %v83, %v74
    %v85 = vlaneseq
    %v86 = vshrl.u32 %v85, 7
    %v87 = vsub.s32 2, %v86
    %v88 = vrot.slane %v78, %v87
    %v89 = vadd.f32 %v84, %v88
    %v90 = vxor.u32 %v89, 2147483648
    %v91 = vmul.f32 %v90, 1.442695
    %v92 = vpow.pop %v91
    %v93 = vadd.f32 %v92, 1.0
    %v94 = vrcp.pop %v93
    %v95 = vmul.f32 1.0, %v94
    %v96 = vlaneseq
    %v97 = vshrl.u32 %v96, 7
    %v98 = vsub.s32 0, %v97
    %v99 = vrot.slane %v78, %v98
    %v100 = vmul.f32 %v99, %v95
    %v101 = vlaneseq
    %v102 = vshrl.u32 %v101, 7
    %v103 = vsub.s32 3, %v102
    %v104 = vrot.slane %v78, %v103
    %v105 = vmul.f32 %v104, %v74
    %v106 = vadd.f32 %v100, %v105
    %v107 = vlaneseq
    %v108 = vshrl.u32 %v107, 7
    %v109 = vsub.s32 4, %v108
    %v110 = vrot.slane %v78, %v109
    %v111 = vadd.f32 %v106, %v110
    %v112 = vlaneseq
    %v113 = vshrl.u32 %v112, 7
    %v114 = vsub.s32 6, %v113
    %v115 = vrot.slane %v78, %v114
    %v116 = vmul.f32 %v115, %v74
    %v117 = vlaneseq
    %v118 = vshrl.u32 %v117, 7
    %v119 = vsub.s32 7, %v118
    %v120 = vrot.slane %v78, %v119
    %v121 = vadd.f32 %v116, %v120
    %v122 = vxor.u32 %v121, 2147483648
    %v123 = vmul.f32 %v122, 1.442695
    %v124 = vpow.pop %v123
    %v125 = vadd.f32 %v124, 1.0
    %v126 = vrcp.pop %v125
    %v127 = vmul.f32 1.0, %v126
    %v128 = vlaneseq
    %v129 = vshrl.u32 %v128, 7
    %v130 = vsub.s32 5, %v129
    %v131 = vrot.slane %v78, %v130
    %v132 = vmul.f32 %v131, %v127
    %v133 = vlaneseq
    %v134 = vshrl.u32 %v133, 7
    %v135 = vsub.s32 0, %v134
    %v136 = vrot.slane %v79, %v135
    %v137 = vmul.f32 %v136, %v74
    %v138 = vadd.f32 %v132, %v137
    %v139 = vlaneseq
    %v140 = vshrl.u32 %v139, 7
    %v141 = vsub.s32 1, %v140
    %v142 = vrot.slane %v79, %v141
    %v143 = vadd.f32 %v138, %v142
    %v144 = vsub.f32 %v73, %v111
    %v145 = vmul.f32 %v144, %v143
    %v146 = vadd.f32 %v145, %v111
    %147 = vst [vmem:[#allocation2] sm:$0xff] %v146
    %p148 = scmp.eq.s32.totalorder 0, 0
    // Predicated region
    $region38: #{tpu_custom_call.1} parent=1 // pred_check
      %p149 = pneg %p148
    $region39: #{tpu_custom_call.1} parent=1 // pred_check_branch
      %151 = sbr.rel (%p149) target = $region41
    $region40: #{tpu_custom_call.1} parent=1 // pred_region
      %v152 = vld [vmem:[%s4] sm:$0x1]
      %v154 = vlaneseq
      %v155 = vshrl.u32 %v154, 7
      %v156 = vsub.s32 0, %v155
      %v157 = vrot.slane %v152, %v156
      %159 = vst [vmem:[#allocation11] sm:$0xff] %v157
    $region41: #{tpu_custom_call.1} parent=1 // pred_fallthru
      _
    %v160 = vld [vmem:[#allocation11] sm:$0xff]
    %v161 = vld [vmem:[#allocation2] sm:$0xff]
    %v162 = vld [vmem:[#allocation9] sm:$0xff]
    %v163 = vld [vmem:[#allocation9 + $0x8] sm:$0xff]
    %v164 = vld [vmem:[#allocation9 + $0x10] sm:$0xff]
    %v165 = vld [vmem:[#allocation9 + $0x18] sm:$0xff]
    %v166 = vld [vmem:[#allocation9 + $0x20] sm:$0xff]
    %v167 = vld [vmem:[#allocation9 + $0x28] sm:$0xff]
    %v168 = vld [vmem:[#allocation9 + $0x30] sm:$0xff]
    %v169 = vld [vmem:[#allocation9 + $0x38] sm:$0xff]
    %v170 = vld [vmem:[#allocation9 + $0x40] sm:$0xff]
    %v171 = vld [vmem:[#allocation9 + $0x48] sm:$0xff]
    %v172 = vld [vmem:[#allocation9 + $0x50] sm:$0xff]
    %v173 = vld [vmem:[#allocation9 + $0x58] sm:$0xff]
    %v174 = vld [vmem:[#allocation9 + $0x60] sm:$0xff]
    %v175 = vld [vmem:[#allocation9 + $0x68] sm:$0xff]
    %v176 = vld [vmem:[#allocation9 + $0x70] sm:$0xff]
    %v177 = vld [vmem:[#allocation9 + $0x78] sm:$0xff]
    %178 = vmatprep.subr.mxu0 0.0
    %179 = vmatpush1.msra.mxu0 %v162
    %180 = vmatprep.subr.mxu0 0.0
    %181 = vmatpush1.msra.mxu0 %v163
    %182 = vmatprep.subr.mxu0 0.0
    %183 = vmatpush1.msra.mxu0 %v164
    %184 = vmatprep.subr.mxu0 0.0
    %185 = vmatpush1.msra.mxu0 %v165
    %186 = vmatprep.subr.mxu0 0.0
    %187 = vmatpush1.msra.mxu0 %v166
    %188 = vmatprep.subr.mxu0 0.0
    %189 = vmatpush1.msra.mxu0 %v167
    %190 = vmatprep.subr.mxu0 0.0
    %191 = vmatpush1.msra.mxu0 %v168
    %192 = vmatprep.subr.mxu0 0.0
    %193 = vmatpush1.msra.mxu0 %v169
    %194 = vmatprep.subr.mxu0 0.0
    %195 = vmatpush1.msra.mxu0 %v170
    %196 = vmatprep.subr.mxu0 0.0
    %197 = vmatpush1.msra.mxu0 %v171
    %198 = vmatprep.subr.mxu0 0.0
    %199 = vmatpush1.msra.mxu0 %v172
    %200 = vmatprep.subr.mxu0 0.0
    %201 = vmatpush1.msra.mxu0 %v173
    %202 = vmatprep.subr.mxu0 0.0
    %203 = vmatpush1.msra.mxu0 %v174
    %204 = vmatprep.subr.mxu0 0.0
    %205 = vmatpush1.msra.mxu0 %v175
    %206 = vmatprep.subr.mxu0 0.0
    %207 = vmatpush1.msra.mxu0 %v176
    %208 = vmatprep.subr.mxu0 0.0
    %209 = vmatpush1.msra.mxu0 %v177
    %210 = vmatprep.subr.mxu0 0.0
    %211 = vmatpush1.msra.mxu0 0.0
    %212 = vmatprep.subr.mxu0 0.0
    %213 = vmatpush1.msra.mxu0 0.0
    %214 = vmatprep.subr.mxu0 0.0
    %215 = vmatpush1.msra.mxu0 0.0
    %216 = vmatprep.subr.mxu0 0.0
    %217 = vmatpush1.msra.mxu0 0.0
    %218 = vmatprep.subr.mxu0 0.0
    %219 = vmatpush1.msra.mxu0 0.0
    %220 = vmatprep.subr.mxu0 0.0
    %221 = vmatpush1.msra.mxu0 0.0
    %222 = vmatprep.subr.mxu0 0.0
    %223 = vmatpush1.msra.mxu0 0.0
    %224 = vmatprep.subr.mxu0 0.0
    %225 = vmatpush1.msra.mxu0 0.0
    %226 = vmatprep.subr.mxu0 0.0
    %227 = vmatpush1.msra.mxu0 0.0
    %228 = vmatprep.subr.mxu0 0.0
    %229 = vmatpush1.msra.mxu0 0.0
    %230 = vmatprep.subr.mxu0 0.0
    %231 = vmatpush1.msra.mxu0 0.0
    %232 = vmatprep.subr.mxu0 0.0
    %233 = vmatpush1.msra.mxu0 0.0
    %234 = vmatprep.subr.mxu0 0.0
    %235 = vmatpush1.msra.mxu0 0.0
    %236 = vmatprep.subr.mxu0 0.0
    %237 = vmatpush1.msra.mxu0 0.0
    %238 = vmatprep.subr.mxu0 0.0
    %239 = vmatpush1.msra.mxu0 0.0
    %240 = vmatprep.subr.mxu0 0.0
    %241 = vmatpush1.msra.mxu0 0.0
    %242 = vmatprep.mubr.f32.mxu0 0.0
    %243 = vmatmul.mubr.f32.gmra.mrb[0].mxu0 %v161
    %v244 = vpop.f32.mrb[0].mxu0
    %v245 = vadd.f32 0.0, %v244
    %v246 = vpop.f32.mrb[0].mxu0
    %247 = vdwg.mxu0
    %v248 = vadd.f32 %v160, %v245
    %249 = vst [vmem:[#allocation11] sm:$0xff] %v248
    // Predicated region
    $region42: #{tpu_custom_call.1} parent=1 // pred_check
      _
    $region43: #{tpu_custom_call.1} parent=1 // pred_check_branch
      %251 = sbr.rel (0) target = $region45
    $region44: #{tpu_custom_call.1} parent=1 // pred_region
      %s253 = ssub.s32 128, 128
      %254 = vsyncadd [#allocation5], %s253
      %s256 = sshll.u32 [#allocation11], 4
      %s257 = int_to_ptr.vmem [resolvable:$true] %s256
      %259 = dma.vmem_to_hbm [thread:$0]  %s257, 128, %s5, [#allocation5]
    $region45: #{tpu_custom_call.1} parent=1 // pred_fallthru
      _
    // Predicated region
    $region46: #{tpu_custom_call.1} parent=1 // pred_check
      _
    $region47: #{tpu_custom_call.1} parent=1 // pred_check_branch
      %261 = sbr.rel (0) target = $region49
    $region48: #{tpu_custom_call.1} parent=1 // pred_region
      %262 = dma.done [#allocation5], 128
    $region49: #{tpu_custom_call.1} parent=1 // pred_fallthru
      _
    %263 = vsyncpa [#allocation4], 1
    %264 = vsyncpa [#allocation7], 1
    %265 = vsyncpa [#allocation10], 1
    %266 = vsyncpa [#allocation5], 1

</llo_original>
